<compile_context>
chip_gen: v7x
topology: tpu7x:2x2x1
jax: 0.10.0
libtpu: 0.0.40
codegen_flags: <defaults>
</compile_context>

<pallas_src>
import jax
import jax.numpy as jnp
from jax.experimental import pallas as pl
from jax.experimental.pallas import tpu as pltpu


def _lora_linear_kernel(x_ref, wt_ref, xa_ref, b_ref, bias_ref, o_ref, acc_ref):
    """One (i, j, k) grid step of out = x @ W^T + (x@A*scaling) @ B + bias."""
    k = pl.program_id(2)            # K-tile index (reduction, innermost)
    nk = pl.num_programs(2)

    @pl.when(k == 0)
    def _init():
        acc_ref[...] = jnp.zeros_like(acc_ref)

    # Base (dequantized-HQQ stand-in) matmul: compute_dtype inputs, f32 MXU accum.
    acc_ref[...] += jnp.dot(x_ref[...], wt_ref[...],
                            preferred_element_type=jnp.float32)

    # Epilogue once the K reduction is complete: LoRA up-projection + bias.
    @pl.when(k == nk - 1)
    def _finalize():
        lora = jnp.dot(xa_ref[...], b_ref[...],
                       preferred_element_type=jnp.float32)
        out = acc_ref[...] + lora + bias_ref[...].astype(jnp.float32)
        o_ref[...] = out.astype(o_ref.dtype)             # single cast


def _round_up(x, m):
    return (x + m - 1) // m * m


def _choose_tile(dim, preferred, unit):
    """Tile size: a multiple of `unit`; the array dim is zero-padded up to it."""
    if dim <= preferred:
        return _round_up(max(dim, 1), unit)
    return max((preferred // unit) * unit, unit)


def _vmem_capacity_bytes():
    """Per-core VMEM capacity; conservative (v7x-safe) fallback if unavailable."""
    try:
        info = pltpu.get_tpu_info()
        for attr in ("vmem_capacity_bytes", "vmem_size_bytes", "vmem_bytes"):
            val = getattr(info, attr, None)
            if val:
                return int(val)
    except Exception:
        pass
    return 64 * 1024 * 1024


def hqq_linear_lora_forward(x2d, w_t, lora_a, lora_b, bias, *,
                            scaling,
                            compute_dtype=jnp.bfloat16,
                            train_dtype=jnp.float32,
                            tm=512, tn=512, tk=512):
    M, K = x2d.shape
    Kw, N = w_t.shape
    assert Kw == K
    r = lora_a.shape[1]
    assert lora_a.shape == (K, r) and lora_b.shape == (r, N)
    out_dtype = x2d.dtype
    bias2d = jnp.reshape(bias, (1, N)).astype(jnp.float32)

    # LoRA down-projection hoisted to XLA, in train_dtype (f32 default), pre-scaled.
    # Doing it here (before casting x to bf16) preserves the torch train_dtype path.
    xa = jnp.dot(x2d.astype(train_dtype), lora_a.astype(train_dtype),
                 preferred_element_type=jnp.float32) * float(scaling)
    xa = xa.astype(compute_dtype)
    b_up = lora_b.astype(compute_dtype)

    # Pre-cast the streamed operands to compute_dtype (halves x / W HBM traffic,
    # removes per-step VPU casts inside the kernel).
    x_c = x2d.astype(compute_dtype)
    w_c = w_t.astype(compute_dtype)

    # Tile selection: lane-dense, 256-aligned for v6e/v7x's 256x256 MXU.
    tm = min(tm, _round_up(M, 8))
    tn = _choose_tile(N, tn, 256)
    tk = _choose_tile(K, tk, 256)

    # Zero-pad ragged dims (instead of falling back to full-dimension blocks).
    Mp, Np, Kp = _round_up(M, tm), _round_up(N, tn), _round_up(K, tk)
    if (Mp, Kp) != (M, K):
        x_c = jnp.pad(x_c, ((0, Mp - M), (0, Kp - K)))
    if Mp != M:
        xa = jnp.pad(xa, ((0, Mp - M), (0, 0)))
    if (Kp, Np) != (K, N):
        w_c = jnp.pad(w_c, ((0, Kp - K), (0, Np - N)))
    if Np != N:
        b_up = jnp.pad(b_up, ((0, 0), (0, Np - N)))
        bias2d = jnp.pad(bias2d, ((0, 0), (0, Np - N)))

    grid = (Mp // tm, Np // tn, Kp // tk)

    # VMEM budget: double-buffered tiles + f32 accumulator, capped per generation.
    cd = jnp.dtype(compute_dtype).itemsize
    est = 2 * (tm * tk * cd          # x tile
               + tk * tn * cd        # W^T tile
               + tm * r * cd         # hoisted (x@A)*scaling tile
               + r * tn * cd         # lora_B tile
               + tn * 4              # bias tile
               + tm * tn * jnp.dtype(out_dtype).itemsize)   # output tile
    est += tm * tn * 4               # f32 accumulator scratch
    vmem_ceiling = min(max(_vmem_capacity_bytes() - 16 * 1024 * 1024,
                           32 * 1024 * 1024),
                       100 * 1024 * 1024)
    vmem_limit = min(max(2 * est + (2 << 20), 32 * 1024 * 1024), vmem_ceiling)

    out_padded = pl.pallas_call(
        _lora_linear_kernel,
        out_shape=jax.ShapeDtypeStruct((Mp, Np), out_dtype),
        grid_spec=pltpu.PrefetchScalarGridSpec(
            num_scalar_prefetch=0,
            grid=grid,
            in_specs=[
                pl.BlockSpec((tm, tk), lambda i, j, k: (i, k)),   # x tile
                # W^T tile.  If profiling shows this DMA exposed at small M
                # (decode), add pipeline_mode=pl.Buffered(3).
                pl.BlockSpec((tk, tn), lambda i, j, k: (k, j)),
                pl.BlockSpec((tm, r),  lambda i, j, k: (i, 0)),   # (x@A)*scaling
                pl.BlockSpec((r, tn),  lambda i, j, k: (0, j)),   # lora_B tile
                pl.BlockSpec((1, tn),  lambda i, j, k: (0, j)),   # bias tile
            ],
            out_specs=pl.BlockSpec((tm, tn), lambda i, j, k: (i, j)),
            scratch_shapes=[
                pltpu.VMEM((tm, tn), jnp.float32),   # base+LoRA accumulator
            ],
        ),
        compiler_params=pltpu.CompilerParams(
            # No cross-N kernel state anymore -> both M and N can megacore-shard.
            dimension_semantics=("parallel", "parallel", "arbitrary"),
            vmem_limit_bytes=int(vmem_limit)),
    )(x_c, w_c, xa, b_up, bias2d)

    return out_padded[:M, :N]


if __name__ == "__main__":
    # Small shapes consistent with the module's forward.
    batch, seq = 2, 8
    in_features, out_features, r = 256, 512, 16
    lora_alpha = 32
    scaling = lora_alpha / r
    x_dtype = jnp.float32
    train_dtype = jnp.float32        # peft_config default train_dtype = torch.float
    compute_dtype = jnp.bfloat16     # bf16 MXU path for the base matmul

    key = jax.random.PRNGKey(0)
    kx, kw, ka, kb, kbias = jax.random.split(key, 5)

    x = jax.random.normal(kx, (batch, seq, in_features), dtype=x_dtype)
    # torch Linear weight is (out, in); kernel consumes W^T = (in, out).
    w = jax.random.normal(kw, (out_features, in_features), dtype=jnp.float32) * 0.02
    w_t = jnp.transpose(w)                                        # (K, N)
    # NOTE: module init zeros lora_B; use nonzero values to exercise the path.
    lora_a = jax.random.normal(ka, (in_features, r), dtype=train_dtype) * 0.05
    lora_b = jax.random.normal(kb, (r, out_features), dtype=train_dtype) * 0.05
    bias = jax.random.normal(kbias, (1, out_features), dtype=x_dtype) * 0.1

    x2d = x.reshape(batch * seq, in_features)
    out2d = hqq_linear_lora_forward(
        x2d, w_t, lora_a, lora_b, bias,
        scaling=scaling, compute_dtype=compute_dtype, train_dtype=train_dtype)
    out = out2d.reshape(batch, seq, out_features)
    jax.block_until_ready(out)

    # Pure-JAX reference mirroring the kernel's numerics.
    base_ref = jnp.dot(x2d.astype(compute_dtype), w_t.astype(compute_dtype),
                       preferred_element_type=jnp.float32)
    xa_ref = (jnp.dot(x2d.astype(train_dtype), lora_a,
                      preferred_element_type=jnp.float32)
              * scaling).astype(compute_dtype)
    lora_ref = jnp.dot(xa_ref, lora_b.astype(compute_dtype),
                       preferred_element_type=jnp.float32)
    ref = (base_ref + lora_ref + bias.astype(jnp.float32)).astype(x_dtype)
    ref = ref.reshape(batch, seq, out_features)

    assert jnp.allclose(out, ref, atol=5e-3, rtol=5e-3), "mismatch vs reference"
    print("KERNEL_OK")
</pallas_src>

<mosaic_0001>
module attributes {stable_mosaic.version = 11 : i64} {
  func.func @_lora_linear_kernel(%arg0: i32, %arg1: i32, %arg2: i32, %arg3: memref<16x256xbf16, #tpu.memory_space<vmem>>, %arg4: memref<256x512xbf16, #tpu.memory_space<vmem>>, %arg5: memref<16x16xbf16, #tpu.memory_space<vmem>>, %arg6: memref<16x512xbf16, #tpu.memory_space<vmem>>, %arg7: memref<1x512xf32, #tpu.memory_space<vmem>>, %arg8: memref<16x512xf32, #tpu.memory_space<vmem>>, %arg9: memref<16x512xf32, #tpu.memory_space<vmem>>) attributes {dimension_semantics = [#tpu.dimension_semantics<parallel>, #tpu.dimension_semantics<parallel>, #tpu.dimension_semantics<arbitrary>], iteration_bounds = array<i64: 1, 1, 1>, scalar_prefetch = 0 : i64, scratch_operands = 1 : i64, tpu.core_type = #tpu.core_type<tc>, window_params = [{transform_indices = @transform_0, window_bounds = array<i64: 16, 256>}, {transform_indices = @transform_1, window_bounds = array<i64: 256, 512>}, {transform_indices = @transform_2, window_bounds = array<i64: 16, 16>}, {transform_indices = @transform_3, window_bounds = array<i64: 16, 512>}, {transform_indices = @transform_4, window_bounds = array<i64: 1, 512>}, {transform_indices = @transform_5, window_bounds = array<i64: 16, 512>}]} {
    %c0_i32 = arith.constant 0 : i32
    %0 = arith.cmpi eq, %arg2, %c0_i32 : i32
    %1 = arith.extui %0 : i1 to i32
    %c0_i32_0 = arith.constant 0 : i32
    %2 = arith.cmpi ne, %1, %c0_i32_0 : i32
    scf.if %2 {
      %cst_10 = arith.constant 0.000000e+00 : f32
      %12 = vector.broadcast %cst_10 : f32 to vector<16x512xf32>
      %c0_11 = arith.constant 0 : index
      %c0_12 = arith.constant 0 : index
      %13 = vector.load %arg9[%c0_11, %c0_12] : memref<16x512xf32, #tpu.memory_space<vmem>>, vector<16x512xf32>
      tpu.vector_store %arg9[%c0_11, %c0_12], %12 {strides = array<i32>} : memref<16x512xf32, #tpu.memory_space<vmem>>, vector<16x512xf32>,
    } else {
    }
    %c0 = arith.constant 0 : index
    %c0_1 = arith.constant 0 : index
    %3 = vector.load %arg9[%c0, %c0_1] : memref<16x512xf32, #tpu.memory_space<vmem>>, vector<16x512xf32>
    %c0_2 = arith.constant 0 : index
    %c0_3 = arith.constant 0 : index
    %4 = vector.load %arg3[%c0_2, %c0_3] : memref<16x256xbf16, #tpu.memory_space<vmem>>, vector<16x256xbf16>
    %c0_4 = arith.constant 0 : index
    %c0_5 = arith.constant 0 : index
    %5 = vector.load %arg4[%c0_4, %c0_5] : memref<256x512xbf16, #tpu.memory_space<vmem>>, vector<256x512xbf16>
    %cst = arith.constant dense<0.000000e+00> : vector<16x512xf32>
    %6 = tpu.matmul %4, %5, %cst {dimension_numbers = #tpu.dot_dimension_numbers<[1], [0], [0], [1], [0, 0, 1, 1], [], []>} : vector<16x256xbf16>, vector<256x512xbf16>, vector<16x512xf32> -> vector<16x512xf32>
    %7 = arith.addf %3, %6 : vector<16x512xf32>
    %c0_6 = arith.constant 0 : index
    %c0_7 = arith.constant 0 : index
    %8 = vector.load %arg9[%c0_6, %c0_7] : memref<16x512xf32, #tpu.memory_space<vmem>>, vector<16x512xf32>
    tpu.vector_store %arg9[%c0_6, %c0_7], %7 {strides = array<i32>} : memref<16x512xf32, #tpu.memory_space<vmem>>, vector<16x512xf32>,
    %c0_i32_8 = arith.constant 0 : i32
    %9 = arith.cmpi eq, %arg2, %c0_i32_8 : i32
    %10 = arith.extui %9 : i1 to i32
    %c0_i32_9 = arith.constant 0 : i32
    %11 = arith.cmpi ne, %10, %c0_i32_9 : i32
    scf.if %11 {
      %c0_10 = arith.constant 0 : index
      %c0_11 = arith.constant 0 : index
      %12 = vector.load %arg5[%c0_10, %c0_11] : memref<16x16xbf16, #tpu.memory_space<vmem>>, vector<16x16xbf16>
      %c0_12 = arith.constant 0 : index
      %c0_13 = arith.constant 0 : index
      %13 = vector.load %arg6[%c0_12, %c0_13] : memref<16x512xbf16, #tpu.memory_space<vmem>>, vector<16x512xbf16>
      %cst_14 = arith.constant dense<0.000000e+00> : vector<16x512xf32>
      %14 = tpu.matmul %12, %13, %cst_14 {dimension_numbers = #tpu.dot_dimension_numbers<[1], [0], [0], [1], [0, 0, 1, 1], [], []>} : vector<16x16xbf16>, vector<16x512xbf16>, vector<16x512xf32> -> vector<16x512xf32>
      %c0_15 = arith.constant 0 : index
      %c0_16 = arith.constant 0 : index
      %15 = vector.load %arg9[%c0_15, %c0_16] : memref<16x512xf32, #tpu.memory_space<vmem>>, vector<16x512xf32>
      %16 = arith.addf %15, %14 : vector<16x512xf32>
      %c0_17 = arith.constant 0 : index
      %c0_18 = arith.constant 0 : index
      %17 = vector.load %arg7[%c0_17, %c0_18] : memref<1x512xf32, #tpu.memory_space<vmem>>, vector<1x512xf32>
      %18 = vector.broadcast %17 : vector<1x512xf32> to vector<16x512xf32>
      %19 = arith.addf %16, %18 : vector<16x512xf32>
      %c0_19 = arith.constant 0 : index
      %c0_20 = arith.constant 0 : index
      %20 = vector.load %arg8[%c0_19, %c0_20] : memref<16x512xf32, #tpu.memory_space<vmem>>, vector<16x512xf32>
      tpu.vector_store %arg8[%c0_19, %c0_20], %19 {strides = array<i32>} : memref<16x512xf32, #tpu.memory_space<vmem>>, vector<16x512xf32>,
    } else {
    }
    return
  }
  func.func @transform_0(%arg0: i32, %arg1: i32, %arg2: i32) -> (i32, i32) {
    %c0_i32 = arith.constant 0 : i32
    return %arg0, %arg2 : i32, i32
  }
  func.func @transform_1(%arg0: i32, %arg1: i32, %arg2: i32) -> (i32, i32) {
    %c0_i32 = arith.constant 0 : i32
    return %arg2, %arg1 : i32, i32
  }
  func.func @transform_2(%arg0: i32, %arg1: i32, %arg2: i32) -> (i32, i32) {
    %c0_i32 = arith.constant 0 : i32
    %c0_i32_0 = arith.constant 0 : i32
    return %arg0, %c0_i32 : i32, i32
  }
  func.func @transform_3(%arg0: i32, %arg1: i32, %arg2: i32) -> (i32, i32) {
    %c0_i32 = arith.constant 0 : i32
    %c0_i32_0 = arith.constant 0 : i32
    return %c0_i32, %arg1 : i32, i32
  }
  func.func @transform_4(%arg0: i32, %arg1: i32, %arg2: i32) -> (i32, i32) {
    %c0_i32 = arith.constant 0 : i32
    %c0_i32_0 = arith.constant 0 : i32
    return %c0_i32, %arg1 : i32, i32
  }
  func.func @transform_5(%arg0: i32, %arg1: i32, %arg2: i32) -> (i32, i32) {
    %c0_i32 = arith.constant 0 : i32
    return %arg0, %arg1 : i32, i32
  }
}

</mosaic_0001>

<llo_original>
// kernel: tpu_custom_call.1
$region0: #{tpu_custom_call.1}
  #allocation0 [shape = 'u32[]', space=smem, size = 0x4, offset = 0x4, fixed_abs, tag = 'smem constant byte address 0x4 - core index']
  #allocation1 [shape = 'u32[144,128]{1,0:T(1,128)}', space=vmem, size = 0x12000, scoped, tag = 'internal scratch']
  #allocation2 [shape = 'f32[16,512]{1,0:T(8,128)}', space=vmem, size = 0x8000, scoped, tag = 'scratch operand']
  %s0 = inlined_call_operand.hbm [shape: bf16[16,256], index: 0, kind: input, shape index: {}]
  %s1 = inlined_call_operand.hbm [shape: bf16[256,512], index: 1, kind: input, shape index: {}]
  %s2 = inlined_call_operand.hbm [shape: bf16[16,16], index: 2, kind: input, shape index: {}]
  %s3 = inlined_call_operand.hbm [shape: bf16[16,512], index: 3, kind: input, shape index: {}]
  %s4 = inlined_call_operand.vmem [shape: f32[1,512], index: 4, kind: input, shape index: {}]
  %s5 = inlined_call_operand.hbm [shape: f32[16,512], index: 5, kind: output, shape index: {}]
  %s6 = sld [smem:[#allocation0]]
  $region54: #{tpu_custom_call.1} parent=0
    _
  %s8 = ssub.s32 1, %s6
  %s9 = scalar_select 0, %s8, %s6
  $region1: #{tpu_custom_call.1} parent=0
    #allocation3 [shape = 'u8[8192]{0}', space=vmem, size = 0x2000, scoped, tag = 'input window, operand 0, single buffered']
    #allocation4 [shape = 's32[1]{0}', space=sflag, size = 0x4, scoped, tag = 'scoped memory for tpu_custom_call.1']
    #allocation5 [shape = 's32[1]{0}', space=sflag, size = 0x4, scoped, tag = 'scoped memory for tpu_custom_call.1']
    #allocation6 [shape = 'u8[262144]{0}', space=vmem, size = 0x40000, scoped, tag = 'input window, operand 1, single buffered']
    #allocation7 [shape = 's32[1]{0}', space=sflag, size = 0x4, scoped, tag = 'scoped memory for tpu_custom_call.1']
    #allocation8 [shape = 'u8[4096]{0}', space=vmem, size = 0x1000, scoped, tag = 'input window, operand 2, single buffered']
    #allocation9 [shape = 'u8[16384]{0}', space=vmem, size = 0x4000, scoped, tag = 'input window, operand 3, single buffered']
    #allocation10 [shape = 's32[1]{0}', space=sflag, size = 0x4, scoped, tag = 'scoped memory for tpu_custom_call.1']
    #allocation11 [shape = 'u8[32768]{0}', space=vmem, size = 0x8000, scoped, tag = 'output window, operand 0, single buffered']
    %10 = vsyncpa [#allocation4], 0
    %11 = vsyncpa [#allocation7], 0
    %12 = vsyncpa [#allocation10], 0
    %13 = vsyncpa [#allocation5], 0
    // Predicated region
    $region2: #{tpu_custom_call.1} parent=1 // pred_check
      _
    $region3: #{tpu_custom_call.1} parent=1 // pred_check_branch
      %15 = sbr.rel (0) target = $region5
    $region4: #{tpu_custom_call.1} parent=1 // pred_region
      %s17 = ssub.s32 256, 256
      %18 = vsyncadd [#allocation4], %s17
      %s19 = sshll.u32 [#allocation3], 4
      %s20 = int_to_ptr.vmem [resolvable:$true] %s19
      %25 = dma.hbm_to_vmem [thread:$0]  %s0, 256, %s20, [#allocation4], 128, 128, 8
    $region5: #{tpu_custom_call.1} parent=1 // pred_fallthru
      _
    // Predicated region
    $region6: #{tpu_custom_call.1} parent=1 // pred_check
      _
    $region7: #{tpu_custom_call.1} parent=1 // pred_check_branch
      %27 = sbr.rel (0) target = $region9
    $region8: #{tpu_custom_call.1} parent=1 // pred_region
      %s29 = ssub.s32 8192, 8192
      %30 = vsyncadd [#allocation7], %s29
      %s31 = sshll.u32 [#allocation6], 4
      %s32 = int_to_ptr.vmem [resolvable:$true] %s31
      %37 = dma.hbm_to_vmem [thread:$0]  %s1, 8192, %s32, [#allocation7], 256, 256, 16
    $region9: #{tpu_custom_call.1} parent=1 // pred_fallthru
      _
    // Predicated region
    $region10: #{tpu_custom_call.1} parent=1 // pred_check
      _
    $region11: #{tpu_custom_call.1} parent=1 // pred_check_branch
      %39 = sbr.rel (0) target = $region13
    $region12: #{tpu_custom_call.1} parent=1 // pred_region
      %s41 = ssub.s32 128, 128
      %42 = vsyncadd [#allocation7], %s41
      %s43 = sshll.u32 [#allocation8], 4
      %s44 = int_to_ptr.vmem [resolvable:$true] %s43
      %49 = dma.hbm_to_vmem [thread:$0]  %s2, 128, %s44, [#allocation7], 64, 64, 4
    $region13: #{tpu_custom_call.1} parent=1 // pred_fallthru
      _
    // Predicated region
    $region14: #{tpu_custom_call.1} parent=1 // pred_check
      _
    $region15: #{tpu_custom_call.1} parent=1 // pred_check_branch
      %51 = sbr.rel (0) target = $region17
    $region16: #{tpu_custom_call.1} parent=1 // pred_region
      %s53 = ssub.s32 512, 512
      %54 = vsyncadd [#allocation10], %s53
      %s55 = sshll.u32 [#allocation9], 4
      %s56 = int_to_ptr.vmem [resolvable:$true] %s55
      %61 = dma.hbm_to_vmem [thread:$0]  %s3, 512, %s56, [#allocation10], 256, 256, 16
    $region17: #{tpu_custom_call.1} parent=1 // pred_fallthru
      _
    // Predicated region
    $region18: #{tpu_custom_call.1} parent=1 // pred_check
      _
    $region19: #{tpu_custom_call.1} parent=1 // pred_check_branch
      %63 = sbr.rel (0) target = $region21
    $region20: #{tpu_custom_call.1} parent=1 // pred_region
      _
    $region21: #{tpu_custom_call.1} parent=1 // pred_fallthru
      _
    // Predicated region
    $region22: #{tpu_custom_call.1} parent=1 // pred_check
      _
    $region23: #{tpu_custom_call.1} parent=1 // pred_check_branch
      %65 = sbr.rel (0) target = $region25
    $region24: #{tpu_custom_call.1} parent=1 // pred_region
      %66 = dma.done [#allocation4], 256
    $region25: #{tpu_custom_call.1} parent=1 // pred_fallthru
      _
    // Predicated region
    $region26: #{tpu_custom_call.1} parent=1 // pred_check
      _
    $region27: #{tpu_custom_call.1} parent=1 // pred_check_branch
      %68 = sbr.rel (0) target = $region29
    $region28: #{tpu_custom_call.1} parent=1 // pred_region
      %69 = dma.done [#allocation7], 8192
    $region29: #{tpu_custom_call.1} parent=1 // pred_fallthru
      _
    // Predicated region
    $region30: #{tpu_custom_call.1} parent=1 // pred_check
      _
    $region31: #{tpu_custom_call.1} parent=1 // pred_check_branch
      %71 = sbr.rel (0) target = $region33
    $region32: #{tpu_custom_call.1} parent=1 // pred_region
      %72 = dma.done [#allocation7], 128
    $region33: #{tpu_custom_call.1} parent=1 // pred_fallthru
      _
    // Predicated region
    $region34: #{tpu_custom_call.1} parent=1 // pred_check
      _
    $region35: #{tpu_custom_call.1} parent=1 // pred_check_branch
      %74 = sbr.rel (0) target = $region37
    $region36: #{tpu_custom_call.1} parent=1 // pred_region
      %75 = dma.done [#allocation10], 512
    $region37: #{tpu_custom_call.1} parent=1 // pred_fallthru
      _
    %p77 = scmp.eq.s32.totalorder 0, 0
    // Predicated region
    $region38: #{tpu_custom_call.1} parent=1 // pred_check
      %p78 = pneg %p77
    $region39: #{tpu_custom_call.1} parent=1 // pred_check_branch
      %80 = sbr.rel (%p78) target = $region41
    $region40: #{tpu_custom_call.1} parent=1 // pred_region
      %81 = vst [vmem:[#allocation2] sm:$0xff] 0.0
      %82 = vst [vmem:[#allocation2 + $0x8] sm:$0xff] 0.0
      %83 = vst [vmem:[#allocation2 + $0x10] sm:$0xff] 0.0
      %84 = vst [vmem:[#allocation2 + $0x18] sm:$0xff] 0.0
      %85 = vst [vmem:[#allocation2 + $0x20] sm:$0xff] 0.0
      %86 = vst [vmem:[#allocation2 + $0x28] sm:$0xff] 0.0
      %87 = vst [vmem:[#allocation2 + $0x30] sm:$0xff] 0.0
      %88 = vst [vmem:[#allocation2 + $0x38] sm:$0xff] 0.0
    $region41: #{tpu_custom_call.1} parent=1 // pred_fallthru
      _
    %v89 = vld [vmem:[#allocation2] sm:$0xff]
    %v90 = vld [vmem:[#allocation2 + $0x8] sm:$0xff]
    %v91 = vld [vmem:[#allocation2 + $0x10] sm:$0xff]
    %v92 = vld [vmem:[#allocation2 + $0x18] sm:$0xff]
    %v93 = vld [vmem:[#allocation2 + $0x20] sm:$0xff]
    %v94 = vld [vmem:[#allocation2 + $0x28] sm:$0xff]
    %v95 = vld [vmem:[#allocation2 + $0x30] sm:$0xff]
    %v96 = vld [vmem:[#allocation2 + $0x38] sm:$0xff]
    %v97 = vld [vmem:[#allocation3] sm:$0xff]
    %v98 = vld [vmem:[#allocation3 + $0x8] sm:$0xff]
    %v99 = vld [vmem:[#allocation6] sm:$0xff]
    %v100 = vld [vmem:[#allocation6 + $0x8] sm:$0xff]
    %v101 = vld [vmem:[#allocation6 + $0x10] sm:$0xff]
    %v102 = vld [vmem:[#allocation6 + $0x18] sm:$0xff]
    %v103 = vld [vmem:[#allocation6 + $0x20] sm:$0xff]
    %v104 = vld [vmem:[#allocation6 + $0x28] sm:$0xff]
    %v105 = vld [vmem:[#allocation6 + $0x30] sm:$0xff]
    %v106 = vld [vmem:[#allocation6 + $0x38] sm:$0xff]
    %v107 = vld [vmem:[#allocation6 + $0x40] sm:$0xff]
    %v108 = vld [vmem:[#allocation6 + $0x48] sm:$0xff]
    %v109 = vld [vmem:[#allocation6 + $0x50] sm:$0xff]
    %v110 = vld [vmem:[#allocation6 + $0x58] sm:$0xff]
    %v111 = vld [vmem:[#allocation6 + $0x60] sm:$0xff]
    %v112 = vld [vmem:[#allocation6 + $0x68] sm:$0xff]
    %v113 = vld [vmem:[#allocation6 + $0x70] sm:$0xff]
    %v114 = vld [vmem:[#allocation6 + $0x78] sm:$0xff]
    %v115 = vld [vmem:[#allocation6 + $0x80] sm:$0xff]
    %v116 = vld [vmem:[#allocation6 + $0x88] sm:$0xff]
    %v117 = vld [vmem:[#allocation6 + $0x90] sm:$0xff]
    %v118 = vld [vmem:[#allocation6 + $0x98] sm:$0xff]
    %v119 = vld [vmem:[#allocation6 + $0xa0] sm:$0xff]
    %v120 = vld [vmem:[#allocation6 + $0xa8] sm:$0xff]
    %v121 = vld [vmem:[#allocation6 + $0xb0] sm:$0xff]
    %v122 = vld [vmem:[#allocation6 + $0xb8] sm:$0xff]
    %v123 = vld [vmem:[#allocation6 + $0xc0] sm:$0xff]
    %v124 = vld [vmem:[#allocation6 + $0xc8] sm:$0xff]
    %v125 = vld [vmem:[#allocation6 + $0xd0] sm:$0xff]
    %v126 = vld [vmem:[#allocation6 + $0xd8] sm:$0xff]
    %v127 = vld [vmem:[#allocation6 + $0xe0] sm:$0xff]
    %v128 = vld [vmem:[#allocation6 + $0xe8] sm:$0xff]
    %v129 = vld [vmem:[#allocation6 + $0xf0] sm:$0xff]
    %v130 = vld [vmem:[#allocation6 + $0xf8] sm:$0xff]
    %v131 = vld [vmem:[#allocation6 + $0x100] sm:$0xff]
    %v132 = vld [vmem:[#allocation6 + $0x108] sm:$0xff]
    %v133 = vld [vmem:[#allocation6 + $0x110] sm:$0xff]
    %v134 = vld [vmem:[#allocation6 + $0x118] sm:$0xff]
    %v135 = vld [vmem:[#allocation6 + $0x120] sm:$0xff]
    %v136 = vld [vmem:[#allocation6 + $0x128] sm:$0xff]
    %v137 = vld [vmem:[#allocation6 + $0x130] sm:$0xff]
    %v138 = vld [vmem:[#allocation6 + $0x138] sm:$0xff]
    %v139 = vld [vmem:[#allocation6 + $0x140] sm:$0xff]
    %v140 = vld [vmem:[#allocation6 + $0x148] sm:$0xff]
    %v141 = vld [vmem:[#allocation6 + $0x150] sm:$0xff]
    %v142 = vld [vmem:[#allocation6 + $0x158] sm:$0xff]
    %v143 = vld [vmem:[#allocation6 + $0x160] sm:$0xff]
    %v144 = vld [vmem:[#allocation6 + $0x168] sm:$0xff]
    %v145 = vld [vmem:[#allocation6 + $0x170] sm:$0xff]
    %v146 = vld [vmem:[#allocation6 + $0x178] sm:$0xff]
    %v147 = vld [vmem:[#allocation6 + $0x180] sm:$0xff]
    %v148 = vld [vmem:[#allocation6 + $0x188] sm:$0xff]
    %v149 = vld [vmem:[#allocation6 + $0x190] sm:$0xff]
    %v150 = vld [vmem:[#allocation6 + $0x198] sm:$0xff]
    %v151 = vld [vmem:[#allocation6 + $0x1a0] sm:$0xff]
    %v152 = vld [vmem:[#allocation6 + $0x1a8] sm:$0xff]
    %v153 = vld [vmem:[#allocation6 + $0x1b0] sm:$0xff]
    %v154 = vld [vmem:[#allocation6 + $0x1b8] sm:$0xff]
    %v155 = vld [vmem:[#allocation6 + $0x1c0] sm:$0xff]
    %v156 = vld [vmem:[#allocation6 + $0x1c8] sm:$0xff]
    %v157 = vld [vmem:[#allocation6 + $0x1d0] sm:$0xff]
    %v158 = vld [vmem:[#allocation6 + $0x1d8] sm:$0xff]
    %v159 = vld [vmem:[#allocation6 + $0x1e0] sm:$0xff]
    %v160 = vld [vmem:[#allocation6 + $0x1e8] sm:$0xff]
    %v161 = vld [vmem:[#allocation6 + $0x1f0] sm:$0xff]
    %v162 = vld [vmem:[#allocation6 + $0x1f8] sm:$0xff]
    %v165 = vunpack.c.l.b16 %v97
    %v166 = vunpack.c.h.b16 %v97
    %v167 = vunpack.c.l.b16 %v98
    %v168 = vunpack.c.h.b16 %v98
    %v169 = vpack.c.b16 %v167, %v165
    %v170 = vpack.c.b16 %v168, %v166
    %v237 = vunpack.c.l.b16 %v99
    %v238 = vunpack.c.h.b16 %v99
    %v239 = vunpack.c.l.b16 %v100
    %v240 = vunpack.c.h.b16 %v100
    %v241 = vunpack.c.l.b16 %v101
    %v242 = vunpack.c.h.b16 %v101
    %v243 = vunpack.c.l.b16 %v102
    %v244 = vunpack.c.h.b16 %v102
    %v245 = vunpack.c.l.b16 %v103
    %v246 = vunpack.c.h.b16 %v103
    %v247 = vunpack.c.l.b16 %v104
    %v248 = vunpack.c.h.b16 %v104
    %v249 = vunpack.c.l.b16 %v105
    %v250 = vunpack.c.h.b16 %v105
    %v251 = vunpack.c.l.b16 %v106
    %v252 = vunpack.c.h.b16 %v106
    %v253 = vunpack.c.l.b16 %v107
    %v254 = vunpack.c.h.b16 %v107
    %v255 = vunpack.c.l.b16 %v108
    %v256 = vunpack.c.h.b16 %v108
    %v257 = vunpack.c.l.b16 %v109
    %v258 = vunpack.c.h.b16 %v109
    %v259 = vunpack.c.l.b16 %v110
    %v260 = vunpack.c.h.b16 %v110
    %v261 = vunpack.c.l.b16 %v111
    %v262 = vunpack.c.h.b16 %v111
    %v263 = vunpack.c.l.b16 %v112
    %v264 = vunpack.c.h.b16 %v112
    %v265 = vunpack.c.l.b16 %v113
    %v266 = vunpack.c.h.b16 %v113
    %v267 = vunpack.c.l.b16 %v114
    %v268 = vunpack.c.h.b16 %v114
    %v269 = vunpack.c.l.b16 %v115
    %v270 = vunpack.c.h.b16 %v115
    %v271 = vunpack.c.l.b16 %v116
    %v272 = vunpack.c.h.b16 %v116
    %v273 = vunpack.c.l.b16 %v117
    %v274 = vunpack.c.h.b16 %v117
    %v275 = vunpack.c.l.b16 %v118
    %v276 = vunpack.c.h.b16 %v118
    %v277 = vunpack.c.l.b16 %v119
    %v278 = vunpack.c.h.b16 %v119
    %v279 = vunpack.c.l.b16 %v120
    %v280 = vunpack.c.h.b16 %v120
    %v281 = vunpack.c.l.b16 %v121
    %v282 = vunpack.c.h.b16 %v121
    %v283 = vunpack.c.l.b16 %v122
    %v284 = vunpack.c.h.b16 %v122
    %v285 = vunpack.c.l.b16 %v123
    %v286 = vunpack.c.h.b16 %v123
    %v287 = vunpack.c.l.b16 %v124
    %v288 = vunpack.c.h.b16 %v124
    %v289 = vunpack.c.l.b16 %v125
    %v290 = vunpack.c.h.b16 %v125
    %v291 = vunpack.c.l.b16 %v126
    %v292 = vunpack.c.h.b16 %v126
    %v293 = vunpack.c.l.b16 %v127
    %v294 = vunpack.c.h.b16 %v127
    %v295 = vunpack.c.l.b16 %v128
    %v296 = vunpack.c.h.b16 %v128
    %v297 = vunpack.c.l.b16 %v129
    %v298 = vunpack.c.h.b16 %v129
    %v299 = vunpack.c.l.b16 %v130
    %v300 = vunpack.c.h.b16 %v130
    %v301 = vunpack.c.l.b16 %v131
    %v302 = vunpack.c.h.b16 %v131
    %v303 = vunpack.c.l.b16 %v132
    %v304 = vunpack.c.h.b16 %v132
    %v305 = vunpack.c.l.b16 %v133
    %v306 = vunpack.c.h.b16 %v133
    %v307 = vunpack.c.l.b16 %v134
    %v308 = vunpack.c.h.b16 %v134
    %v309 = vunpack.c.l.b16 %v135
    %v310 = vunpack.c.h.b16 %v135
    %v311 = vunpack.c.l.b16 %v136
    %v312 = vunpack.c.h.b16 %v136
    %v313 = vunpack.c.l.b16 %v137
    %v314 = vunpack.c.h.b16 %v137
    %v315 = vunpack.c.l.b16 %v138
    %v316 = vunpack.c.h.b16 %v138
    %v317 = vunpack.c.l.b16 %v139
    %v318 = vunpack.c.h.b16 %v139
    %v319 = vunpack.c.l.b16 %v140
    %v320 = vunpack.c.h.b16 %v140
    %v321 = vunpack.c.l.b16 %v141
    %v322 = vunpack.c.h.b16 %v141
    %v323 = vunpack.c.l.b16 %v142
    %v324 = vunpack.c.h.b16 %v142
    %v325 = vunpack.c.l.b16 %v143
    %v326 = vunpack.c.h.b16 %v143
    %v327 = vunpack.c.l.b16 %v144
    %v328 = vunpack.c.h.b16 %v144
    %v329 = vunpack.c.l.b16 %v145
    %v330 = vunpack.c.h.b16 %v145
    %v331 = vunpack.c.l.b16 %v146
    %v332 = vunpack.c.h.b16 %v146
    %v333 = vunpack.c.l.b16 %v147
    %v334 = vunpack.c.h.b16 %v147
    %v335 = vunpack.c.l.b16 %v148
    %v336 = vunpack.c.h.b16 %v148
    %v337 = vunpack.c.l.b16 %v149
    %v338 = vunpack.c.h.b16 %v149
    %v339 = vunpack.c.l.b16 %v150
    %v340 = vunpack.c.h.b16 %v150
    %v341 = vunpack.c.l.b16 %v151
    %v342 = vunpack.c.h.b16 %v151
    %v343 = vunpack.c.l.b16 %v152
    %v344 = vunpack.c.h.b16 %v152
    %v345 = vunpack.c.l.b16 %v153
    %v346 = vunpack.c.h.b16 %v153
    %v347 = vunpack.c.l.b16 %v154
    %v348 = vunpack.c.h.b16 %v154
    %v349 = vunpack.c.l.b16 %v155
    %v350 = vunpack.c.h.b16 %v155
    %v351 = vunpack.c.l.b16 %v156
    %v352 = vunpack.c.h.b16 %v156
    %v353 = vunpack.c.l.b16 %v157
    %v354 = vunpack.c.h.b16 %v157
    %v355 = vunpack.c.l.b16 %v158
    %v356 = vunpack.c.h.b16 %v158
    %v357 = vunpack.c.l.b16 %v159
    %v358 = vunpack.c.h.b16 %v159
    %v359 = vunpack.c.l.b16 %v160
    %v360 = vunpack.c.h.b16 %v160
    %v361 = vunpack.c.l.b16 %v161
    %v362 = vunpack.c.h.b16 %v161
    %v363 = vunpack.c.l.b16 %v162
    %v364 = vunpack.c.h.b16 %v162
    %v365 = vpack.c.b16 %v241, %v237
    %v366 = vpack.c.b16 %v242, %v238
    %v367 = vpack.c.b16 %v243, %v239
    %v368 = vpack.c.b16 %v244, %v240
    %v369 = vpack.c.b16 %v249, %v245
    %v370 = vpack.c.b16 %v250, %v246
    %v371 = vpack.c.b16 %v251, %v247
    %v372 = vpack.c.b16 %v252, %v248
    %v373 = vpack.c.b16 %v257, %v253
    %v374 = vpack.c.b16 %v258, %v254
    %v375 = vpack.c.b16 %v259, %v255
    %v376 = vpack.c.b16 %v260, %v256
    %v377 = vpack.c.b16 %v265, %v261
    %v378 = vpack.c.b16 %v266, %v262
    %v379 = vpack.c.b16 %v267, %v263
    %v380 = vpack.c.b16 %v268, %v264
    %v381 = vpack.c.b16 %v273, %v269
    %v382 = vpack.c.b16 %v274, %v270
    %v383 = vpack.c.b16 %v275, %v271
    %v384 = vpack.c.b16 %v276, %v272
    %v385 = vpack.c.b16 %v281, %v277
    %v386 = vpack.c.b16 %v282, %v278
    %v387 = vpack.c.b16 %v283, %v279
    %v388 = vpack.c.b16 %v284, %v280
    %v389 = vpack.c.b16 %v289, %v285
    %v390 = vpack.c.b16 %v290, %v286
    %v391 = vpack.c.b16 %v291, %v287
    %v392 = vpack.c.b16 %v292, %v288
    %v393 = vpack.c.b16 %v297, %v293
    %v394 = vpack.c.b16 %v298, %v294
    %v395 = vpack.c.b16 %v299, %v295
    %v396 = vpack.c.b16 %v300, %v296
    %v397 = vpack.c.b16 %v305, %v301
    %v398 = vpack.c.b16 %v306, %v302
    %v399 = vpack.c.b16 %v307, %v303
    %v400 = vpack.c.b16 %v308, %v304
    %v401 = vpack.c.b16 %v313, %v309
    %v402 = vpack.c.b16 %v314, %v310
    %v403 = vpack.c.b16 %v315, %v311
    %v404 = vpack.c.b16 %v316, %v312
    %v405 = vpack.c.b16 %v321, %v317
    %v406 = vpack.c.b16 %v322, %v318
    %v407 = vpack.c.b16 %v323, %v319
    %v408 = vpack.c.b16 %v324, %v320
    %v409 = vpack.c.b16 %v329, %v325
    %v410 = vpack.c.b16 %v330, %v326
    %v411 = vpack.c.b16 %v331, %v327
    %v412 = vpack.c.b16 %v332, %v328
    %v413 = vpack.c.b16 %v337, %v333
    %v414 = vpack.c.b16 %v338, %v334
    %v415 = vpack.c.b16 %v339, %v335
    %v416 = vpack.c.b16 %v340, %v336
    %v417 = vpack.c.b16 %v345, %v341
    %v418 = vpack.c.b16 %v346, %v342
    %v419 = vpack.c.b16 %v347, %v343
    %v420 = vpack.c.b16 %v348, %v344
    %v421 = vpack.c.b16 %v353, %v349
    %v422 = vpack.c.b16 %v354, %v350
    %v423 = vpack.c.b16 %v355, %v351
    %v424 = vpack.c.b16 %v356, %v352
    %v425 = vpack.c.b16 %v361, %v357
    %v426 = vpack.c.b16 %v362, %v358
    %v427 = vpack.c.b16 %v363, %v359
    %v428 = vpack.c.b16 %v364, %v360
    %493 = vmatprep.subr.bf16.mxu0 %v366
    %494 = vmatpush1.bf16.msra.mxu0 %v365
    %495 = vmatprep.subr.bf16.mxu0 %v370
    %496 = vmatpush1.bf16.msra.mxu0 %v369
    %497 = vmatprep.subr.bf16.mxu0 %v374
    %498 = vmatpush1.bf16.msra.mxu0 %v373
    %499 = vmatprep.subr.bf16.mxu0 %v378
    %500 = vmatpush1.bf16.msra.mxu0 %v377
    %501 = vmatprep.subr.bf16.mxu0 %v382
    %502 = vmatpush1.bf16.msra.mxu0 %v381
    %503 = vmatprep.subr.bf16.mxu0 %v386
    %504 = vmatpush1.bf16.msra.mxu0 %v385
    %505 = vmatprep.subr.bf16.mxu0 %v390
    %506 = vmatpush1.bf16.msra.mxu0 %v389
    %507 = vmatprep.subr.bf16.mxu0 %v394
    %508 = vmatpush1.bf16.msra.mxu0 %v393
    %509 = vmatprep.subr.bf16.mxu0 %v398
    %510 = vmatpush1.bf16.msra.mxu0 %v397
    %511 = vmatprep.subr.bf16.mxu0 %v402
    %512 = vmatpush1.bf16.msra.mxu0 %v401
    %513 = vmatprep.subr.bf16.mxu0 %v406
    %514 = vmatpush1.bf16.msra.mxu0 %v405
    %515 = vmatprep.subr.bf16.mxu0 %v410
    %516 = vmatpush1.bf16.msra.mxu0 %v409
    %517 = vmatprep.subr.bf16.mxu0 %v414
    %518 = vmatpush1.bf16.msra.mxu0 %v413
    %519 = vmatprep.subr.bf16.mxu0 %v418
    %520 = vmatpush1.bf16.msra.mxu0 %v417
    %521 = vmatprep.subr.bf16.mxu0 %v422
    %522 = vmatpush1.bf16.msra.mxu0 %v421
    %523 = vmatprep.subr.bf16.mxu0 %v426
    %524 = vmatpush1.bf16.msra.mxu0 %v425
    %525 = vmatprep.mubr.bf16.mxu0 %v170
    %526 = vmatmul.mubr.bf16.gmra.mrb[0].mxu0 %v169
    %v527 = vpop.f32.mrb[0].mxu0
    %v528 = vadd.f32 0.0, %v527
    %v529 = vpop.f32.mrb[0].mxu0
    %v530 = vadd.f32 0.0, %v529
    %v531 = vpop.f32.mrb[0].mxu0
    %v532 = vadd.f32 0.0, %v531
    %v533 = vpop.f32.mrb[0].mxu0
    %v534 = vadd.f32 0.0, %v533
    %535 = vdwg.mxu0
    %536 = vmatprep.subr.bf16.mxu0 %v368
    %537 = vmatpush1.bf16.msra.mxu0 %v367
    %538 = vmatprep.subr.bf16.mxu0 %v372
    %539 = vmatpush1.bf16.msra.mxu0 %v371
    %540 = vmatprep.subr.bf16.mxu0 %v376
    %541 = vmatpush1.bf16.msra.mxu0 %v375
    %542 = vmatprep.subr.bf16.mxu0 %v380
    %543 = vmatpush1.bf16.msra.mxu0 %v379
    %544 = vmatprep.subr.bf16.mxu0 %v384
    %545 = vmatpush1.bf16.msra.mxu0 %v383
    %546 = vmatprep.subr.bf16.mxu0 %v388
    %547 = vmatpush1.bf16.msra.mxu0 %v387
    %548 = vmatprep.subr.bf16.mxu0 %v392
    %549 = vmatpush1.bf16.msra.mxu0 %v391
    %550 = vmatprep.subr.bf16.mxu0 %v396
    %551 = vmatpush1.bf16.msra.mxu0 %v395
    %552 = vmatprep.subr.bf16.mxu0 %v400
    %553 = vmatpush1.bf16.msra.mxu0 %v399
    %554 = vmatprep.subr.bf16.mxu0 %v404
    %555 = vmatpush1.bf16.msra.mxu0 %v403
    %556 = vmatprep.subr.bf16.mxu0 %v408
    %557 = vmatpush1.bf16.msra.mxu0 %v407
    %558 = vmatprep.subr.bf16.mxu0 %v412
    %559 = vmatpush1.bf16.msra.mxu0 %v411
    %560 = vmatprep.subr.bf16.mxu0 %v416
    %561 = vmatpush1.bf16.msra.mxu0 %v415
    %562 = vmatprep.subr.bf16.mxu0 %v420
    %563 = vmatpush1.bf16.msra.mxu0 %v419
    %564 = vmatprep.subr.bf16.mxu0 %v424
    %565 = vmatpush1.bf16.msra.mxu0 %v423
    %566 = vmatprep.subr.bf16.mxu0 %v428
    %567 = vmatpush1.bf16.msra.mxu0 %v427
    %568 = vmatprep.mubr.bf16.mxu0 %v170
    %569 = vmatmul.mubr.bf16.gmra.mrb[0].mxu0 %v169
    %v570 = vpop.f32.mrb[0].mxu0
    %v571 = vadd.f32 0.0, %v570
    %v572 = vpop.f32.mrb[0].mxu0
    %v573 = vadd.f32 0.0, %v572
    %v574 = vpop.f32.mrb[0].mxu0
    %v575 = vadd.f32 0.0, %v574
    %v576 = vpop.f32.mrb[0].mxu0
    %v577 = vadd.f32 0.0, %v576
    %578 = vdwg.mxu0
    %v579 = vadd.f32 %v89, %v528
    %v580 = vadd.f32 %v90, %v530
    %v581 = vadd.f32 %v91, %v571
    %v582 = vadd.f32 %v92, %v573
    %v583 = vadd.f32 %v93, %v532
    %v584 = vadd.f32 %v94, %v534
    %v585 = vadd.f32 %v95, %v575
    %v586 = vadd.f32 %v96, %v577
    %587 = vst [vmem:[#allocation2] sm:$0xff] %v579
    %588 = vst [vmem:[#allocation2 + $0x8] sm:$0xff] %v580
    %589 = vst [vmem:[#allocation2 + $0x10] sm:$0xff] %v581
    %590 = vst [vmem:[#allocation2 + $0x18] sm:$0xff] %v582
    %591 = vst [vmem:[#allocation2 + $0x20] sm:$0xff] %v583
    %592 = vst [vmem:[#allocation2 + $0x28] sm:$0xff] %v584
    %593 = vst [vmem:[#allocation2 + $0x30] sm:$0xff] %v585
    %594 = vst [vmem:[#allocation2 + $0x38] sm:$0xff] %v586
    // Predicated region
    $region42: #{tpu_custom_call.1} parent=1 // pred_check
      %p595 = pneg %p77
    $region43: #{tpu_custom_call.1} parent=1 // pred_check_branch
      %597 = sbr.rel (%p595) target = $region45
    $region44: #{tpu_custom_call.1} parent=1 // pred_region
      %v598 = vld [vmem:[#allocation8] sm:$0xf]
      %v599 = vld [vmem:[#allocation8 + $0x4] sm:$0xf]
      %v600 = vld [vmem:[#allocation9] sm:$0xff]
      %v601 = vld [vmem:[#allocation9 + $0x8] sm:$0xff]
      %v602 = vld [vmem:[#allocation9 + $0x10] sm:$0xff]
      %v603 = vld [vmem:[#allocation9 + $0x18] sm:$0xff]
      %v606 = vunpack.c.l.b16 %v598
      %v607 = vunpack.c.l.b16 %v599
      %v608 = vpack.c.b16 %v607, %v606
      %v613 = vunpack.c.l.b16 %v600
      %v614 = vunpack.c.h.b16 %v600
      %v615 = vunpack.c.l.b16 %v601
      %v616 = vunpack.c.h.b16 %v601
      %v617 = vunpack.c.l.b16 %v602
      %v618 = vunpack.c.h.b16 %v602
      %v619 = vunpack.c.l.b16 %v603
      %v620 = vunpack.c.h.b16 %v603
      %v621 = vpack.c.b16 %v617, %v613
      %v622 = vpack.c.b16 %v618, %v614
      %v623 = vpack.c.b16 %v619, %v615
      %v624 = vpack.c.b16 %v620, %v616
      %vm629 = vcmask 130048
      %v631 = vsel %vm629, %v608, 0
      %633 = vmatprep.subr.bf16.mxu0 %v622
      %634 = vmatpush1.bf16.msra.mxu0 %v621
      %635 = vmatprep.subr.bf16.mxu0 0
      %636 = vmatpush1.bf16.msra.mxu0 0
      %637 = vmatprep.subr.bf16.mxu0 0
      %638 = vmatpush1.bf16.msra.mxu0 0
      %639 = vmatprep.subr.bf16.mxu0 0
      %640 = vmatpush1.bf16.msra.mxu0 0
      %641 = vmatprep.subr.bf16.mxu0 0
      %642 = vmatpush1.bf16.msra.mxu0 0
      %643 = vmatprep.subr.bf16.mxu0 0
      %644 = vmatpush1.bf16.msra.mxu0 0
      %645 = vmatprep.subr.bf16.mxu0 0
      %646 = vmatpush1.bf16.msra.mxu0 0
      %647 = vmatprep.subr.bf16.mxu0 0
      %648 = vmatpush1.bf16.msra.mxu0 0
      %649 = vmatprep.subr.bf16.mxu0 0
      %650 = vmatpush1.bf16.msra.mxu0 0
      %651 = vmatprep.subr.bf16.mxu0 0
      %652 = vmatpush1.bf16.msra.mxu0 0
      %653 = vmatprep.subr.bf16.mxu0 0
      %654 = vmatpush1.bf16.msra.mxu0 0
      %655 = vmatprep.subr.bf16.mxu0 0
      %656 = vmatpush1.bf16.msra.mxu0 0
      %657 = vmatprep.subr.bf16.mxu0 0
      %658 = vmatpush1.bf16.msra.mxu0 0
      %659 = vmatprep.subr.bf16.mxu0 0
      %660 = vmatpush1.bf16.msra.mxu0 0
      %661 = vmatprep.subr.bf16.mxu0 0
      %662 = vmatpush1.bf16.msra.mxu0 0
      %663 = vmatprep.subr.bf16.mxu0 0
      %664 = vmatpush1.bf16.msra.mxu0 0
      %665 = vmatprep.mubr.bf16.mxu0 0
      %666 = vmatmul.mubr.bf16.gmra.mrb[0].mxu0 %v631
      %v667 = vpop.f32.mrb[0].mxu0
      %v668 = vadd.f32 0.0, %v667
      %v669 = vpop.f32.mrb[0].mxu0
      %v670 = vadd.f32 0.0, %v669
      %v671 = vpop.f32.mrb[0].mxu0
      %v672 = vadd.f32 0.0, %v671
      %v673 = vpop.f32.mrb[0].mxu0
      %v674 = vadd.f32 0.0, %v673
      %675 = vdwg.mxu0
      %676 = vmatprep.subr.bf16.mxu0 %v624
      %677 = vmatpush1.bf16.msra.mxu0 %v623
      %678 = vmatprep.subr.bf16.mxu0 0
      %679 = vmatpush1.bf16.msra.mxu0 0
      %680 = vmatprep.subr.bf16.mxu0 0
      %681 = vmatpush1.bf16.msra.mxu0 0
      %682 = vmatprep.subr.bf16.mxu0 0
      %683 = vmatpush1.bf16.msra.mxu0 0
      %684 = vmatprep.subr.bf16.mxu0 0
      %685 = vmatpush1.bf16.msra.mxu0 0
      %686 = vmatprep.subr.bf16.mxu0 0
      %687 = vmatpush1.bf16.msra.mxu0 0
      %688 = vmatprep.subr.bf16.mxu0 0
      %689 = vmatpush1.bf16.msra.mxu0 0
      %690 = vmatprep.subr.bf16.mxu0 0
      %691 = vmatpush1.bf16.msra.mxu0 0
      %692 = vmatprep.subr.bf16.mxu0 0
      %693 = vmatpush1.bf16.msra.mxu0 0
      %694 = vmatprep.subr.bf16.mxu0 0
      %695 = vmatpush1.bf16.msra.mxu0 0
      %696 = vmatprep.subr.bf16.mxu0 0
      %697 = vmatpush1.bf16.msra.mxu0 0
      %698 = vmatprep.subr.bf16.mxu0 0
      %699 = vmatpush1.bf16.msra.mxu0 0
      %700 = vmatprep.subr.bf16.mxu0 0
      %701 = vmatpush1.bf16.msra.mxu0 0
      %702 = vmatprep.subr.bf16.mxu0 0
      %703 = vmatpush1.bf16.msra.mxu0 0
      %704 = vmatprep.subr.bf16.mxu0 0
      %705 = vmatpush1.bf16.msra.mxu0 0
      %706 = vmatprep.subr.bf16.mxu0 0
      %707 = vmatpush1.bf16.msra.mxu0 0
      %708 = vmatprep.mubr.bf16.mxu0 0
      %709 = vmatmul.mubr.bf16.gmra.mrb[0].mxu0 %v631
      %v710 = vpop.f32.mrb[0].mxu0
      %v711 = vadd.f32 0.0, %v710
      %v712 = vpop.f32.mrb[0].mxu0
      %v713 = vadd.f32 0.0, %v712
      %v714 = vpop.f32.mrb[0].mxu0
      %v715 = vadd.f32 0.0, %v714
      %v716 = vpop.f32.mrb[0].mxu0
      %v717 = vadd.f32 0.0, %v716
      %718 = vdwg.mxu0
      %v719 = vld [vmem:[#allocation2] sm:$0xff]
      %v720 = vld [vmem:[#allocation2 + $0x8] sm:$0xff]
      %v721 = vld [vmem:[#allocation2 + $0x10] sm:$0xff]
      %v722 = vld [vmem:[#allocation2 + $0x18] sm:$0xff]
      %v723 = vld [vmem:[#allocation2 + $0x20] sm:$0xff]
      %v724 = vld [vmem:[#allocation2 + $0x28] sm:$0xff]
      %v725 = vld [vmem:[#allocation2 + $0x30] sm:$0xff]
      %v726 = vld [vmem:[#allocation2 + $0x38] sm:$0xff]
      %v727 = vadd.f32 %v719, %v668
      %v728 = vadd.f32 %v720, %v670
      %v729 = vadd.f32 %v721, %v711
      %v730 = vadd.f32 %v722, %v713
      %v731 = vadd.f32 %v723, %v672
      %v732 = vadd.f32 %v724, %v674
      %v733 = vadd.f32 %v725, %v715
      %v734 = vadd.f32 %v726, %v717
      %v735 = vld [vmem:[%s4] sm:$0xf]
      %v737 = vlaneseq
      %v738 = vshrl.u32 %v737, 7
      %v739 = vsub.s32 0, %v738
      %v740 = vrot.slane %v735, %v739
      %v741 = vlaneseq
      %v742 = vshrl.u32 %v741, 7
      %v743 = vsub.s32 1, %v742
      %v744 = vrot.slane %v735, %v743
      %v745 = vlaneseq
      %v746 = vshrl.u32 %v745, 7
      %v747 = vsub.s32 2, %v746
      %v748 = vrot.slane %v735, %v747
      %v749 = vlaneseq
      %v750 = vshrl.u32 %v749, 7
      %v751 = vsub.s32 3, %v750
      %v752 = vrot.slane %v735, %v751
      %v757 = vadd.f32 %v727, %v740
      %v758 = vadd.f32 %v728, %v744
      %v759 = vadd.f32 %v729, %v748
      %v760 = vadd.f32 %v730, %v752
      %v761 = vadd.f32 %v731, %v740
      %v762 = vadd.f32 %v732, %v744
      %v763 = vadd.f32 %v733, %v748
      %v764 = vadd.f32 %v734, %v752
      %765 = vst [vmem:[#allocation11] sm:$0xff] %v757
      %766 = vst [vmem:[#allocation11 + $0x8] sm:$0xff] %v758
      %767 = vst [vmem:[#allocation11 + $0x10] sm:$0xff] %v759
      %768 = vst [vmem:[#allocation11 + $0x18] sm:$0xff] %v760
      %769 = vst [vmem:[#allocation11 + $0x20] sm:$0xff] %v761
      %770 = vst [vmem:[#allocation11 + $0x28] sm:$0xff] %v762
      %771 = vst [vmem:[#allocation11 + $0x30] sm:$0xff] %v763
      %772 = vst [vmem:[#allocation11 + $0x38] sm:$0xff] %v764
    $region45: #{tpu_custom_call.1} parent=1 // pred_fallthru
      _
    // Predicated region
    $region46: #{tpu_custom_call.1} parent=1 // pred_check
      _
    $region47: #{tpu_custom_call.1} parent=1 // pred_check_branch
      %774 = sbr.rel (0) target = $region49
    $region48: #{tpu_custom_call.1} parent=1 // pred_region
      %s776 = ssub.s32 1024, 1024
      %777 = vsyncadd [#allocation5], %s776
      %s778 = sshll.u32 [#allocation11], 4
      %s779 = int_to_ptr.vmem [resolvable:$true] %s778
      %784 = dma.vmem_to_hbm [thread:$0]  %s779, 1024, %s5, [#allocation5], 512, 512, 32
    $region49: #{tpu_custom_call.1} parent=1 // pred_fallthru
      _
    // Predicated region
    $region50: #{tpu_custom_call.1} parent=1 // pred_check
      _
    $region51: #{tpu_custom_call.1} parent=1 // pred_check_branch
      %786 = sbr.rel (0) target = $region53
    $region52: #{tpu_custom_call.1} parent=1 // pred_region
      %787 = dma.done [#allocation5], 1024
    $region53: #{tpu_custom_call.1} parent=1 // pred_fallthru
      _
    %788 = vsyncpa [#allocation4], 1
    %789 = vsyncpa [#allocation7], 1
    %790 = vsyncpa [#allocation10], 1
    %791 = vsyncpa [#allocation5], 1

</llo_original>
